<compile_context>
chip_gen: v6e
topology: v6e:2x2x1
jax: 0.10.0
libtpu: 0.0.40
codegen_flags: <defaults>
</compile_context>

<pallas_src>
import jax
import jax.numpy as jnp
from jax import lax
from jax.experimental import pallas as pl
from jax.experimental.pallas import tpu as pltpu

_LANES = 128
_CHUNK_ROWS = 64  # rows per streamed chunk: (64, 128) f32 = 8 vregs per operand


def _round_up(x: int, m: int) -> int:
    return ((x + m - 1) // m) * m


def _make_rosenbrock_kernel(a: float, b: float, tile_rows: int):
    """Kernel with a, b, tile geometry baked in as compile-time constants."""
    n_chunks = tile_rows // _CHUNK_ROWS

    def kernel(params_ref, out_ref, acc_ref):
        # params_ref: (2, tile_rows, 128) VMEM tile; [0] = xeven, [1] = xodd.
        # acc_ref:    (64, 128) f32 VMEM accumulator, resident across the grid.
        # out_ref:    (1, 1) SMEM scalar output.
        step = pl.program_id(0)

        @pl.when(step == 0)
        def _():
            acc_ref[...] = jnp.zeros_like(acc_ref)

        def body(c, carry):
            r0 = pl.multiple_of(c * _CHUNK_ROWS, _CHUNK_ROWS)
            xeven = params_ref[0, pl.ds(r0, _CHUNK_ROWS), :]   # (64, 128)
            xodd = params_ref[1, pl.ds(r0, _CHUNK_ROWS), :]    # (64, 128)
            t = xodd - a
            u = xodd * xodd - xeven
            # Stream straight into the resident accumulator: pure VPU adds,
            # no tile-sized intermediate ever hits VMEM.
            acc_ref[...] += t * t + b * (u * u)
            return carry

        lax.fori_loop(0, n_chunks, body, 0, unroll=False)

        @pl.when(step == pl.num_programs(0) - 1)
        def _():
            # Single cross-lane/sublane (XLU) reduce, once per call.
            out_ref[0, 0] = jnp.sum(acc_ref[...])

    return kernel


def pack_rosenbrock_params(xeven, xodd, a, *, max_tile_rows: int = 4096):
    """One-time (module-init) packing into a sublane-dense (2, rows, 128) slab.

    Padding uses (xodd_pad = a, xeven_pad = a*a) so padded elements contribute
    exactly zero to the sum -> no masking needed inside the kernel.
    Returns (packed, tile_rows); `rows` is a multiple of `tile_rows`.
    """
    a = float(a)
    d = int(xeven.shape[0])
    rows = _round_up(pl.cdiv(d, _LANES), _CHUNK_ROWS)
    tile_rows = max(
        _CHUNK_ROWS, (min(max_tile_rows, rows) // _CHUNK_ROWS) * _CHUNK_ROWS
    )
    rows = _round_up(rows, tile_rows)
    pad = rows * _LANES - d

    xeven_p = jnp.pad(jnp.asarray(xeven, jnp.float32), (0, pad),
                      constant_values=a * a)
    xodd_p = jnp.pad(jnp.asarray(xodd, jnp.float32), (0, pad),
                     constant_values=a)
    packed = jnp.stack([xeven_p, xodd_p], axis=0).reshape(2, rows, _LANES)
    return packed, tile_rows


def rosenbrock_forward_packed(packed, a, b, tile_rows):
    """Kernel path: consumes the persistent packed slab (no per-call repack)."""
    a = float(a)
    b = float(b)
    rows = packed.shape[1]
    assert rows % tile_rows == 0 and tile_rows % _CHUNK_ROWS == 0
    num_steps = rows // tile_rows

    block_bytes = 2 * tile_rows * _LANES * 4
    # Double-buffered input block + accumulator + slack; >= 32 MiB so large
    # tiles still fit, capped below v7x's 64 MiB physical VMEM.
    vmem_limit = int(min(max(32 << 20, 2 * block_bytes + (4 << 20)), 56 << 20))

    kernel = _make_rosenbrock_kernel(a, b, tile_rows)

    out = pl.pallas_call(
        kernel,
        out_shape=jax.ShapeDtypeStruct((1, 1), jnp.float32),
        grid=(num_steps,),
        in_specs=[
            pl.BlockSpec((2, tile_rows, _LANES), lambda i: (0, i, 0)),
        ],
        out_specs=pl.BlockSpec(memory_space=pltpu.SMEM),
        scratch_shapes=[pltpu.VMEM((_CHUNK_ROWS, _LANES), jnp.float32)],
        compiler_params=pltpu.CompilerParams(
            # Reduction axis with a resident accumulator -> "arbitrary".
            dimension_semantics=("arbitrary",),
            vmem_limit_bytes=vmem_limit,
        ),
        cost_estimate=pl.CostEstimate(
            flops=8 * rows * _LANES,
            transcendentals=0,
            bytes_accessed=int(packed.size) * 4 + 4,
        ),
    )(packed)

    return out[0, 0]


def rosenbrock_forward(x, xeven, xodd, a, b, *,
                       small_d_threshold: int = 4096,
                       max_tile_rows: int = 4096):
    """Pallas implementation of Rosenbrock.forward.

    `x` is accepted for signature parity with the PyTorch module but (as in
    the reference) does not participate in the computation.  For small d the
    plain-XLA fast path is used; for large d, prefer packing once via
    `pack_rosenbrock_params` and calling `rosenbrock_forward_packed` so the
    layout cost is not paid per forward.
    """
    del x  # unused by the module's forward
    a = float(a)
    b = float(b)
    d = xeven.shape[0]

    if d <= small_d_threshold:
        # Small-d fast path: XLA fusion beats any kernel launch here.
        xe = jnp.asarray(xeven, jnp.float32)
        xo = jnp.asarray(xodd, jnp.float32)
        t = xo - a
        u = xo * xo - xe
        return jnp.sum(t * t + b * (u * u))

    packed, tile_rows = pack_rosenbrock_params(
        xeven, xodd, a, max_tile_rows=max_tile_rows)
    return rosenbrock_forward_packed(packed, a, b, tile_rows)


def _ref(xeven, xodd, a, b):
    return jnp.sum((xodd - a) ** 2 + b * (xodd ** 2 - xeven) ** 2)


if __name__ == "__main__":
    a = 1.0
    b = 100.0
    key = jax.random.PRNGKey(0)
    k_even, k_odd, k_x, k_even2, k_odd2 = jax.random.split(key, 5)

    # --- case 1: module-sized test (d = 32) via the public forward
    #     (takes the small-d fast path).
    d = 32
    xeven = jax.random.normal(k_even, (d,), dtype=jnp.float32)
    xodd = jax.random.normal(k_odd, (d,), dtype=jnp.float32)
    x = jax.random.normal(k_x, (2, d), dtype=jnp.float32)  # ignored by forward

    result = jax.block_until_ready(rosenbrock_forward(x, xeven, xodd, a, b))
    ref = _ref(xeven, xodd, a, b)
    assert jnp.allclose(result, ref, rtol=1e-5, atol=1e-4), (result, ref)

    # --- case 2: same d = 32 forced through the Pallas kernel path
    #     (pack once, then call the packed forward).
    packed_small, tile_small = pack_rosenbrock_params(xeven, xodd, a)
    result_k = jax.block_until_ready(
        rosenbrock_forward_packed(packed_small, a, b, tile_small))
    assert jnp.allclose(result_k, ref, rtol=1e-5, atol=1e-4), (result_k, ref)

    # --- case 3: larger d with forced small tiles to exercise the multi-step
    #     resident-accumulator / pipelined-DMA path (2 grid steps).
    d2 = 8200
    xeven2 = jax.random.normal(k_even2, (d2,), dtype=jnp.float32)
    xodd2 = jax.random.normal(k_odd2, (d2,), dtype=jnp.float32)
    packed2, tile2 = pack_rosenbrock_params(
        xeven2, xodd2, a, max_tile_rows=_CHUNK_ROWS)
    result2 = jax.block_until_ready(
        rosenbrock_forward_packed(packed2, a, b, tile2))
    ref2 = _ref(xeven2, xodd2, a, b)
    assert jnp.allclose(result2, ref2, rtol=1e-4, atol=1e-2), (result2, ref2)

    print("KERNEL_OK")
</pallas_src>

<mosaic_0001>
module attributes {stable_mosaic.version = 11 : i64} {
  func.func @kernel(%arg0: i32, %arg1: memref<2x64x128xf32, #tpu.memory_space<vmem>>, %arg2: memref<1x1xf32, #tpu.memory_space<smem>>, %arg3: memref<64x128xf32, #tpu.memory_space<vmem>>) attributes {dimension_semantics = [#tpu.dimension_semantics<arbitrary>], iteration_bounds = array<i64: 1>, scalar_prefetch = 0 : i64, scratch_operands = 1 : i64, tpu.core_type = #tpu.core_type<tc>, window_params = [{transform_indices = @transform_0, window_bounds = array<i64: 2, 64, 128>}, {transform_indices = @transform_1, window_bounds = array<i64: 1, 1>}]} {
    %c0_i32 = arith.constant 0 : i32
    %0 = arith.cmpi eq, %arg0, %c0_i32 : i32
    %1 = arith.extui %0 : i1 to i32
    %c0_i32_0 = arith.constant 0 : i32
    %2 = arith.cmpi ne, %1, %c0_i32_0 : i32
    scf.if %2 {
      %cst_11 = arith.constant 0.000000e+00 : f32
      %26 = vector.broadcast %cst_11 : f32 to vector<64x128xf32>
      %c0_12 = arith.constant 0 : index
      %c0_13 = arith.constant 0 : index
      %27 = vector.load %arg3[%c0_12, %c0_13] : memref<64x128xf32, #tpu.memory_space<vmem>>, vector<64x128xf32>
      tpu.vector_store %arg3[%c0_12, %c0_13], %26 {strides = array<i32>} : memref<64x128xf32, #tpu.memory_space<vmem>>, vector<64x128xf32>,
    } else {
    }
    %c0_i32_1 = arith.constant 0 : i32
    %c64_i32 = arith.constant 64 : i32
    %3 = arith.muli %c0_i32_1, %c64_i32 : i32
    %4 = tpu.assume_multiple %3, 64 : i32
    %c0 = arith.constant 0 : index
    %5 = arith.index_cast %4 : i32 to index
    %c0_2 = arith.constant 0 : index
    %6 = vector.load %arg1[%c0, %5, %c0_2] : memref<2x64x128xf32, #tpu.memory_space<vmem>>, vector<1x64x128xf32>
    %7 = vector.shape_cast %6 : vector<1x64x128xf32> to vector<64x128xf32>
    %c1 = arith.constant 1 : index
    %8 = arith.index_cast %4 : i32 to index
    %c0_3 = arith.constant 0 : index
    %9 = vector.load %arg1[%c1, %8, %c0_3] : memref<2x64x128xf32, #tpu.memory_space<vmem>>, vector<1x64x128xf32>
    %10 = vector.shape_cast %9 : vector<1x64x128xf32> to vector<64x128xf32>
    %cst = arith.constant 1.000000e+00 : f32
    %11 = vector.broadcast %cst : f32 to vector<64x128xf32>
    %12 = arith.subf %10, %11 : vector<64x128xf32>
    %13 = arith.mulf %10, %10 : vector<64x128xf32>
    %14 = arith.subf %13, %7 : vector<64x128xf32>
    %c0_4 = arith.constant 0 : index
    %c0_5 = arith.constant 0 : index
    %15 = vector.load %arg3[%c0_4, %c0_5] : memref<64x128xf32, #tpu.memory_space<vmem>>, vector<64x128xf32>
    %16 = arith.mulf %12, %12 : vector<64x128xf32>
    %17 = arith.mulf %14, %14 : vector<64x128xf32>
    %cst_6 = arith.constant 1.000000e+02 : f32
    %18 = vector.broadcast %cst_6 : f32 to vector<64x128xf32>
    %19 = arith.mulf %18, %17 : vector<64x128xf32>
    %20 = arith.addf %16, %19 : vector<64x128xf32>
    %21 = arith.addf %15, %20 : vector<64x128xf32>
    %c0_7 = arith.constant 0 : index
    %c0_8 = arith.constant 0 : index
    %22 = vector.load %arg3[%c0_7, %c0_8] : memref<64x128xf32, #tpu.memory_space<vmem>>, vector<64x128xf32>
    tpu.vector_store %arg3[%c0_7, %c0_8], %21 {strides = array<i32>} : memref<64x128xf32, #tpu.memory_space<vmem>>, vector<64x128xf32>,
    %c1_i32 = arith.constant 1 : i32
    %c0_i32_9 = arith.constant 0 : i32
    %23 = arith.cmpi eq, %arg0, %c0_i32_9 : i32
    %24 = arith.extui %23 : i1 to i32
    %c0_i32_10 = arith.constant 0 : i32
    %25 = arith.cmpi ne, %24, %c0_i32_10 : i32
    scf.if %25 {
      %c0_11 = arith.constant 0 : index
      %c0_12 = arith.constant 0 : index
      %26 = vector.load %arg3[%c0_11, %c0_12] : memref<64x128xf32, #tpu.memory_space<vmem>>, vector<64x128xf32>
      %27 = vector.shape_cast %26 : vector<64x128xf32> to vector<1x64x128xf32>
      %cst_13 = arith.constant dense<0.000000e+00> : vector<1xf32>
      %28 = vector.multi_reduction <add>, %27, %cst_13 [1, 2] : vector<1x64x128xf32> to vector<1xf32>
      %29 = vector.shape_cast %28 : vector<1xf32> to vector<1x1x1xf32>
      %30 = vector.extract %29[0, 0, 0] : f32 from vector<1x1x1xf32>
      %c0_14 = arith.constant 0 : index
      %c0_15 = arith.constant 0 : index
      %31 = memref.load %arg2[%c0_14, %c0_15] : memref<1x1xf32, #tpu.memory_space<smem>>
      memref.store %30, %arg2[%c0_14, %c0_15] : memref<1x1xf32, #tpu.memory_space<smem>>
    } else {
    }
    return
  }
  func.func @transform_0(%arg0: i32) -> (i32, i32, i32) {
    %c0_i32 = arith.constant 0 : i32
    %c0_i32_0 = arith.constant 0 : i32
    %c0_i32_1 = arith.constant 0 : i32
    return %c0_i32, %arg0, %c0_i32_0 : i32, i32, i32
  }
  func.func @transform_1(%arg0: i32) -> (i32, i32) {
    %c0_i32 = arith.constant 0 : i32
    %c0_i32_0 = arith.constant 0 : i32
    %c0_i32_1 = arith.constant 0 : i32
    return %c0_i32, %c0_i32_0 : i32, i32
  }
}

</mosaic_0001>

<llo_original>
// kernel: tpu_custom_call.1
$region0: #{tpu_custom_call.1}
  #allocation0 [shape = 'u32[]', space=smem, size = 0x4, offset = 0x4, fixed_abs, tag = 'smem constant byte address 0x4 - core index']
  #allocation1 [shape = 'u32[144,128]{1,0:T(1,128)}', space=vmem, size = 0x12000, scoped, tag = 'internal scratch']
  #allocation2 [shape = 'f32[64,128]{1,0:T(8,128)}', space=vmem, size = 0x8000, scoped, tag = 'scratch operand']
  %s0 = inlined_call_operand.hbm [shape: f32[2,64,128], index: 0, kind: input, shape index: {}]
  %s1 = inlined_call_operand.hbm [shape: f32[1,1], index: 1, kind: output, shape index: {}]
  %s2 = sld [smem:[#allocation0]]
  $region26: #{tpu_custom_call.1} parent=0
    _
  %s4 = ssub.s32 1, %s2
  %s5 = scalar_select 0, %s4, %s2
  $region1: #{tpu_custom_call.1} parent=0
    #allocation3 [shape = 'u8[65536]{0}', space=vmem, size = 0x10000, scoped, tag = 'input window, operand 0, single buffered']
    #allocation4 [shape = 's32[1]{0}', space=sflag, size = 0x4, scoped, tag = 'scoped memory for tpu_custom_call.1']
    #allocation5 [shape = 's32[1]{0}', space=sflag, size = 0x4, scoped, tag = 'scoped memory for tpu_custom_call.1']
    #allocation6 [shape = 'u8[512]{0}', space=smem, size = 0x200, scoped, tag = 'output window, operand 0, single buffered']
    %6 = vsyncpa [#allocation4], 0
    %7 = vsyncpa [#allocation5], 0
    // Predicated region
    $region2: #{tpu_custom_call.1} parent=1 // pred_check
      _
    $region3: #{tpu_custom_call.1} parent=1 // pred_check_branch
      %9 = sbr.rel (0) target = $region5
    $region4: #{tpu_custom_call.1} parent=1 // pred_region
      %s11 = ssub.s32 2048, 2048
      %12 = vsyncadd [#allocation4], %s11
      %s13 = sshll.u32 [#allocation3], 4
      %s14 = int_to_ptr.vmem [resolvable:$true] %s13
      %19 = dma.hbm_to_vmem [thread:$0]  %s0, 2048, %s14, [#allocation4], 128, 128, 8
    $region5: #{tpu_custom_call.1} parent=1 // pred_fallthru
      _
    // Predicated region
    $region6: #{tpu_custom_call.1} parent=1 // pred_check
      _
    $region7: #{tpu_custom_call.1} parent=1 // pred_check_branch
      %21 = sbr.rel (0) target = $region9
    $region8: #{tpu_custom_call.1} parent=1 // pred_region
      %22 = dma.done [#allocation4], 2048
    $region9: #{tpu_custom_call.1} parent=1 // pred_fallthru
      _
    %p23 = scmp.eq.s32.totalorder 0, 0
    // Predicated region
    $region10: #{tpu_custom_call.1} parent=1 // pred_check
      %p24 = pneg %p23
    $region11: #{tpu_custom_call.1} parent=1 // pred_check_branch
      %26 = sbr.rel (%p24) target = $region13
    $region12: #{tpu_custom_call.1} parent=1 // pred_region
      %27 = vst [vmem:[#allocation2] sm:$0xff] 0.0
      %28 = vst [vmem:[#allocation2 + $0x8] sm:$0xff] 0.0
      %29 = vst [vmem:[#allocation2 + $0x10] sm:$0xff] 0.0
      %30 = vst [vmem:[#allocation2 + $0x18] sm:$0xff] 0.0
      %31 = vst [vmem:[#allocation2 + $0x20] sm:$0xff] 0.0
      %32 = vst [vmem:[#allocation2 + $0x28] sm:$0xff] 0.0
      %33 = vst [vmem:[#allocation2 + $0x30] sm:$0xff] 0.0
      %34 = vst [vmem:[#allocation2 + $0x38] sm:$0xff] 0.0
    $region13: #{tpu_custom_call.1} parent=1 // pred_fallthru
      _
    %v35 = vld [vmem:[#allocation3] sm:$0xff]
    %v36 = vld [vmem:[#allocation3 + $0x8] sm:$0xff]
    %v37 = vld [vmem:[#allocation3 + $0x10] sm:$0xff]
    %v38 = vld [vmem:[#allocation3 + $0x18] sm:$0xff]
    %v39 = vld [vmem:[#allocation3 + $0x20] sm:$0xff]
    %v40 = vld [vmem:[#allocation3 + $0x28] sm:$0xff]
    %v41 = vld [vmem:[#allocation3 + $0x30] sm:$0xff]
    %v42 = vld [vmem:[#allocation3 + $0x38] sm:$0xff]
    %s43 = sadd.s32 0, 64
    %s44 = scalar_lea.vmem [#allocation3], %s43
    %v45 = vld [vmem:[%s44] sm:$0xff]
    %v46 = vld [vmem:[%s44 + $0x8] sm:$0xff]
    %v47 = vld [vmem:[%s44 + $0x10] sm:$0xff]
    %v48 = vld [vmem:[%s44 + $0x18] sm:$0xff]
    %v49 = vld [vmem:[%s44 + $0x20] sm:$0xff]
    %v50 = vld [vmem:[%s44 + $0x28] sm:$0xff]
    %v51 = vld [vmem:[%s44 + $0x30] sm:$0xff]
    %v52 = vld [vmem:[%s44 + $0x38] sm:$0xff]
    %v53 = vsub.f32 %v45, 1.0
    %v54 = vsub.f32 %v46, 1.0
    %v55 = vsub.f32 %v47, 1.0
    %v56 = vsub.f32 %v48, 1.0
    %v57 = vsub.f32 %v49, 1.0
    %v58 = vsub.f32 %v50, 1.0
    %v59 = vsub.f32 %v51, 1.0
    %v60 = vsub.f32 %v52, 1.0
    %v61 = vmul.f32 %v45, %v45
    %v62 = vmul.f32 %v46, %v46
    %v63 = vmul.f32 %v47, %v47
    %v64 = vmul.f32 %v48, %v48
    %v65 = vmul.f32 %v49, %v49
    %v66 = vmul.f32 %v50, %v50
    %v67 = vmul.f32 %v51, %v51
    %v68 = vmul.f32 %v52, %v52
    %v69 = vsub.f32 %v61, %v35
    %v70 = vsub.f32 %v62, %v36
    %v71 = vsub.f32 %v63, %v37
    %v72 = vsub.f32 %v64, %v38
    %v73 = vsub.f32 %v65, %v39
    %v74 = vsub.f32 %v66, %v40
    %v75 = vsub.f32 %v67, %v41
    %v76 = vsub.f32 %v68, %v42
    %v77 = vld [vmem:[#allocation2] sm:$0xff]
    %v78 = vld [vmem:[#allocation2 + $0x8] sm:$0xff]
    %v79 = vld [vmem:[#allocation2 + $0x10] sm:$0xff]
    %v80 = vld [vmem:[#allocation2 + $0x18] sm:$0xff]
    %v81 = vld [vmem:[#allocation2 + $0x20] sm:$0xff]
    %v82 = vld [vmem:[#allocation2 + $0x28] sm:$0xff]
    %v83 = vld [vmem:[#allocation2 + $0x30] sm:$0xff]
    %v84 = vld [vmem:[#allocation2 + $0x38] sm:$0xff]
    %v85 = vmul.f32 %v53, %v53
    %v86 = vmul.f32 %v54, %v54
    %v87 = vmul.f32 %v55, %v55
    %v88 = vmul.f32 %v56, %v56
    %v89 = vmul.f32 %v57, %v57
    %v90 = vmul.f32 %v58, %v58
    %v91 = vmul.f32 %v59, %v59
    %v92 = vmul.f32 %v60, %v60
    %v93 = vmul.f32 %v69, %v69
    %v94 = vmul.f32 %v70, %v70
    %v95 = vmul.f32 %v71, %v71
    %v96 = vmul.f32 %v72, %v72
    %v97 = vmul.f32 %v73, %v73
    %v98 = vmul.f32 %v74, %v74
    %v99 = vmul.f32 %v75, %v75
    %v100 = vmul.f32 %v76, %v76
    %v101 = vmul.f32 %v93, 100.0
    %v102 = vmul.f32 %v94, 100.0
    %v103 = vmul.f32 %v95, 100.0
    %v104 = vmul.f32 %v96, 100.0
    %v105 = vmul.f32 %v97, 100.0
    %v106 = vmul.f32 %v98, 100.0
    %v107 = vmul.f32 %v99, 100.0
    %v108 = vmul.f32 %v100, 100.0
    %v109 = vadd.f32 %v85, %v101
    %v110 = vadd.f32 %v86, %v102
    %v111 = vadd.f32 %v87, %v103
    %v112 = vadd.f32 %v88, %v104
    %v113 = vadd.f32 %v89, %v105
    %v114 = vadd.f32 %v90, %v106
    %v115 = vadd.f32 %v91, %v107
    %v116 = vadd.f32 %v92, %v108
    %v117 = vadd.f32 %v77, %v109
    %v118 = vadd.f32 %v78, %v110
    %v119 = vadd.f32 %v79, %v111
    %v120 = vadd.f32 %v80, %v112
    %v121 = vadd.f32 %v81, %v113
    %v122 = vadd.f32 %v82, %v114
    %v123 = vadd.f32 %v83, %v115
    %v124 = vadd.f32 %v84, %v116
    %125 = vst [vmem:[#allocation2] sm:$0xff] %v117
    %126 = vst [vmem:[#allocation2 + $0x8] sm:$0xff] %v118
    %127 = vst [vmem:[#allocation2 + $0x10] sm:$0xff] %v119
    %128 = vst [vmem:[#allocation2 + $0x18] sm:$0xff] %v120
    %129 = vst [vmem:[#allocation2 + $0x20] sm:$0xff] %v121
    %130 = vst [vmem:[#allocation2 + $0x28] sm:$0xff] %v122
    %131 = vst [vmem:[#allocation2 + $0x30] sm:$0xff] %v123
    %132 = vst [vmem:[#allocation2 + $0x38] sm:$0xff] %v124
    // Predicated region
    $region14: #{tpu_custom_call.1} parent=1 // pred_check
      %p133 = pneg %p23
    $region15: #{tpu_custom_call.1} parent=1 // pred_check_branch
      %135 = sbr.rel (%p133) target = $region17
    $region16: #{tpu_custom_call.1} parent=1 // pred_region
      %v136 = vld [vmem:[#allocation2] sm:$0xff]
      %v137 = vld [vmem:[#allocation2 + $0x8] sm:$0xff]
      %v138 = vld [vmem:[#allocation2 + $0x10] sm:$0xff]
      %v139 = vld [vmem:[#allocation2 + $0x18] sm:$0xff]
      %v140 = vld [vmem:[#allocation2 + $0x20] sm:$0xff]
      %v141 = vld [vmem:[#allocation2 + $0x28] sm:$0xff]
      %v142 = vld [vmem:[#allocation2 + $0x30] sm:$0xff]
      %v143 = vld [vmem:[#allocation2 + $0x38] sm:$0xff]
      %v144 = vadd.f32 %v136, %v137
      %v145 = vadd.f32 %v144, %v138
      %v146 = vadd.f32 %v145, %v139
      %v147 = vadd.f32 %v146, %v140
      %v148 = vadd.f32 %v147, %v141
      %v149 = vadd.f32 %v148, %v142
      %v150 = vadd.f32 %v149, %v143
      %151 = vadd.xlane.f32.xlu0 %v150
      %v152 = vpop.xlane.xlu0 %151
      %v153 = vrot.slane %v152, 4
      %v154 = vadd.f32 %v152, %v153
      %v155 = vrot.slane %v154, 2
      %v156 = vadd.f32 %v154, %v155
      %v157 = vrot.slane %v156, 1
      %v158 = vadd.f32 %v156, %v157
      %s159 = vtos %v158
      %s160 = scalar_lea.smem [#allocation6], 0
      %161 = sst [smem:[%s160]] %s159
    $region17: #{tpu_custom_call.1} parent=1 // pred_fallthru
      _
    // Predicated region
    $region18: #{tpu_custom_call.1} parent=1 // pred_check
      _
    $region19: #{tpu_custom_call.1} parent=1 // pred_check_branch
      %163 = sbr.rel (0) target = $region21
    $region20: #{tpu_custom_call.1} parent=1 // pred_region
      %s165 = ssub.s32 16, 16
      %166 = vsyncadd [#allocation5], %s165
      %169 = dma.smem_to_hbm [#allocation6], 16, %s1, [#allocation5]
    $region21: #{tpu_custom_call.1} parent=1 // pred_fallthru
      _
    // Predicated region
    $region22: #{tpu_custom_call.1} parent=1 // pred_check
      _
    $region23: #{tpu_custom_call.1} parent=1 // pred_check_branch
      %171 = sbr.rel (0) target = $region25
    $region24: #{tpu_custom_call.1} parent=1 // pred_region
      %172 = dma.done [#allocation5], 16
    $region25: #{tpu_custom_call.1} parent=1 // pred_fallthru
      _
    %173 = sfence
    %174 = vsyncpa [#allocation4], 1
    %175 = vsyncpa [#allocation5], 1

</llo_original>
